<compile_context>
chip_gen: v7x
topology: tpu7x:2x2x1
jax: 0.10.0
libtpu: 0.0.40
codegen_flags: <defaults>
</compile_context>

<pallas_src>
import functools

import jax
import jax.numpy as jnp
from jax import lax
from jax.experimental import pallas as pl
from jax.experimental.pallas import tpu as pltpu


BLOCKS = (3, 4, 6, 3)
PLANES = (64, 128, 256, 512)
STRIDES = (1, 2, 2, 2)
EXPANSION = 4
NUM_CLASSES = 1000
BN_EPS = 1e-5


def _round_up(x, m):
    return ((x + m - 1) // m) * m


# ----------------------------- Pallas kernels -------------------------------

def _matmul_kernel(a_ref, b_ref, o_ref, acc_ref):
    @pl.when(pl.program_id(2) == 0)
    def _():
        acc_ref[...] = jnp.zeros_like(acc_ref)

    acc_ref[...] += jnp.dot(a_ref[...], b_ref[...],
                            preferred_element_type=jnp.float32)

    @pl.when(pl.program_id(2) == pl.num_programs(2) - 1)
    def _():
        o_ref[...] = acc_ref[...].astype(o_ref.dtype)


def _matmul_bias_kernel(a_ref, b_ref, bias_ref, o_ref, acc_ref):
    @pl.when(pl.program_id(2) == 0)
    def _():
        acc_ref[...] = jnp.zeros_like(acc_ref)

    acc_ref[...] += jnp.dot(a_ref[...], b_ref[...],
                            preferred_element_type=jnp.float32)

    @pl.when(pl.program_id(2) == pl.num_programs(2) - 1)
    def _():
        o_ref[...] = (acc_ref[...] + bias_ref[...]).astype(o_ref.dtype)


def _bn_stats_kernel(x_ref, s1_ref, s2_ref, acc1_ref, acc2_ref):
    """Per-channel sum and sum-of-squares in one pass over the activation."""
    @pl.when(pl.program_id(0) == 0)
    def _():
        acc1_ref[...] = jnp.zeros_like(acc1_ref)
        acc2_ref[...] = jnp.zeros_like(acc2_ref)

    x = x_ref[...].astype(jnp.float32)
    acc1_ref[...] += jnp.sum(x, axis=0, keepdims=True)
    acc2_ref[...] += jnp.sum(x * x, axis=0, keepdims=True)

    @pl.when(pl.program_id(0) == pl.num_programs(0) - 1)
    def _():
        s1_ref[...] = acc1_ref[...]
        s2_ref[...] = acc2_ref[...]


def _affine_kernel(x_ref, s_ref, b_ref, o_ref, *, relu):
    y = x_ref[...].astype(jnp.float32) * s_ref[...] + b_ref[...]
    if relu:
        y = jnp.maximum(y, 0.0)
    o_ref[...] = y.astype(o_ref.dtype)


def _affine_add_relu_kernel(x_ref, r_ref, s_ref, b_ref, o_ref):
    y = (x_ref[...].astype(jnp.float32) * s_ref[...] + b_ref[...]
         + r_ref[...].astype(jnp.float32))
    o_ref[...] = jnp.maximum(y, 0.0).astype(o_ref.dtype)


# ----------------------------- Pallas wrappers -------------------------------

@jax.jit
def pallas_matmul(a, b, bias=None):
    """C = A @ B on the MXU (bf16 inputs, f32 accumulate), optional fused bias.

    Tiles adapt to the problem: 256x256 output tiles when possible (fills the
    2x256x256 MXUs on v6e/v7x), K tiled by 512 (or a single full-K step).
    Padding only where a dim is genuinely ragged; the contraction dim is
    always zero-padded to a 128 multiple for MXU safety.
    """
    M, K = a.shape
    K2, N = b.shape
    assert K == K2

    # --- tile / padding selection (all static Python on shapes) -------------
    if M >= 256:
        tm, Mp = 256, _round_up(M, 256)
    else:
        tm = _round_up(M, 8)
        Mp = tm
    Kp = K if K % 128 == 0 else _round_up(K, 128)
    tk = 512 if (Kp > 512 and Kp % 512 == 0) else Kp
    Np = N if (N % 128 == 0 or N <= 128) else _round_up(N, 128)
    if Np >= 256 and Np % 256 == 0:
        tn = 256
    elif Np % 128 == 0:
        tn = 128
    else:
        tn = Np                      # small N (e.g. 64): single full-width block

    a = a.astype(jnp.bfloat16)
    b = b.astype(jnp.bfloat16)
    if Mp != M or Kp != K:
        a = jnp.pad(a, ((0, Mp - M), (0, Kp - K)))
    if Kp != K or Np != N:
        b = jnp.pad(b, ((0, Kp - K), (0, Np - N)))

    grid = (Mp // tm, Np // tn, Kp // tk)
    a_spec = pl.BlockSpec((tm, tk), lambda i, j, k: (i, k))
    b_spec = pl.BlockSpec((tk, tn), lambda i, j, k: (k, j))
    o_spec = pl.BlockSpec((tm, tn), lambda i, j, k: (i, j))

    if bias is None:
        kernel = _matmul_kernel
        in_specs = [a_spec, b_spec]
        args = (a, b)
    else:
        bias2 = bias.reshape(1, N).astype(jnp.float32)
        if Np != N:
            bias2 = jnp.pad(bias2, ((0, 0), (0, Np - N)))
        kernel = _matmul_bias_kernel
        in_specs = [a_spec, b_spec,
                    pl.BlockSpec((1, tn), lambda i, j, k: (0, j))]
        args = (a, b, bias2)

    out = pl.pallas_call(
        kernel,
        out_shape=jax.ShapeDtypeStruct((Mp, Np), jnp.float32),
        grid_spec=pltpu.PrefetchScalarGridSpec(
            num_scalar_prefetch=0,
            grid=grid,
            in_specs=in_specs,
            out_specs=o_spec,
            scratch_shapes=[pltpu.VMEM((tm, tn), jnp.float32)]),
        compiler_params=pltpu.CompilerParams(
            dimension_semantics=("parallel", "parallel", "arbitrary")),
    )(*args)

    if Mp != M or Np != N:
        out = out[:M, :N]
    return out


def _block_rows(M, C, itemsize, target_bytes=2 << 20, cap=1024):
    """Largest row block <= cap dividing M, keeping one VMEM buffer <= ~2 MiB."""
    target = max(8, min(cap, target_bytes // max(1, C * itemsize)))
    target -= target % 8
    if M <= target:
        return M
    for bm in range(target, 7, -8):
        if M % bm == 0:
            return bm
    return M  # TODO(synk): ragged M with no mult-of-8 divisor -> single block


def _bn_stats(x2d):
    M, C = x2d.shape
    bm = _block_rows(M, C, x2d.dtype.itemsize)
    return pl.pallas_call(
        _bn_stats_kernel,
        out_shape=(jax.ShapeDtypeStruct((1, C), jnp.float32),
                   jax.ShapeDtypeStruct((1, C), jnp.float32)),
        grid=(M // bm,),
        in_specs=[pl.BlockSpec((bm, C), lambda i: (i, 0))],
        out_specs=(pl.BlockSpec((1, C), lambda i: (0, 0)),
                   pl.BlockSpec((1, C), lambda i: (0, 0))),
        scratch_shapes=[pltpu.VMEM((1, C), jnp.float32),
                        pltpu.VMEM((1, C), jnp.float32)],
        compiler_params=pltpu.CompilerParams(
            dimension_semantics=("arbitrary",)),
    )(x2d)


def _affine(x2d, scale, bias, relu, out_dtype):
    M, C = x2d.shape
    bm = _block_rows(M, C, x2d.dtype.itemsize)
    return pl.pallas_call(
        functools.partial(_affine_kernel, relu=relu),
        out_shape=jax.ShapeDtypeStruct((M, C), out_dtype),
        grid=(M // bm,),
        in_specs=[pl.BlockSpec((bm, C), lambda i: (i, 0)),
                  pl.BlockSpec((1, C), lambda i: (0, 0)),
                  pl.BlockSpec((1, C), lambda i: (0, 0))],
        out_specs=pl.BlockSpec((bm, C), lambda i: (i, 0)),
        compiler_params=pltpu.CompilerParams(
            dimension_semantics=("parallel",)),
    )(x2d, scale, bias)


def _affine_add_relu(x2d, r2d, scale, bias, out_dtype):
    M, C = x2d.shape
    bm = _block_rows(M, C, x2d.dtype.itemsize)
    return pl.pallas_call(
        _affine_add_relu_kernel,
        out_shape=jax.ShapeDtypeStruct((M, C), out_dtype),
        grid=(M // bm,),
        in_specs=[pl.BlockSpec((bm, C), lambda i: (i, 0)),
                  pl.BlockSpec((bm, C), lambda i: (i, 0)),
                  pl.BlockSpec((1, C), lambda i: (0, 0)),
                  pl.BlockSpec((1, C), lambda i: (0, 0))],
        out_specs=pl.BlockSpec((bm, C), lambda i: (i, 0)),
        compiler_params=pltpu.CompilerParams(
            dimension_semantics=("parallel",)),
    )(x2d, r2d, scale, bias)


# ------------------------------- layers --------------------------------------

@functools.partial(jax.jit, static_argnames=("relu",))
def _bn_act_2d(x2, gamma, beta, *, relu):
    """Training-mode BN (+optional ReLU): one Pallas stats pass + one affine."""
    M, C = x2.shape
    s1, s2 = _bn_stats(x2)
    mean = s1 / M
    var = jnp.maximum(s2 / M - mean * mean, 0.0)
    scale = gamma.reshape(1, C) * lax.rsqrt(var + BN_EPS)
    bias = beta.reshape(1, C) - mean * scale
    return _affine(x2, scale, bias, relu, jnp.bfloat16)


@jax.jit
def _bn_add_relu_2d(x2, r2, gamma, beta):
    """Fused bn3 + residual add + ReLU (one Pallas stats pass + one fused pass)."""
    M, C = x2.shape
    s1, s2 = _bn_stats(x2)
    mean = s1 / M
    var = jnp.maximum(s2 / M - mean * mean, 0.0)
    scale = gamma.reshape(1, C) * lax.rsqrt(var + BN_EPS)
    bias = beta.reshape(1, C) - mean * scale
    return _affine_add_relu(x2, r2, scale, bias, jnp.bfloat16)


def batchnorm(x_nhwc, gb, relu):
    gamma, beta = gb
    C = x_nhwc.shape[-1]
    y2 = _bn_act_2d(x_nhwc.reshape(-1, C), gamma, beta, relu=relu)
    return y2.reshape(x_nhwc.shape)


def batchnorm_add_relu(x_nhwc, identity_nhwc, gb):
    gamma, beta = gb
    C = x_nhwc.shape[-1]
    y2 = _bn_add_relu_2d(x_nhwc.reshape(-1, C), identity_nhwc.reshape(-1, C),
                         gamma, beta)
    return y2.reshape(x_nhwc.shape)


@functools.partial(jax.jit, static_argnums=(2, 3))
def conv2d(x_nhwc, w_hwio, stride, padding):
    """x: (N,H,W,C) NHWC; w: (kh, kw, Cin, Cout) pre-transformed bf16."""
    N, H, W, C = x_nhwc.shape
    kh, kw, Cin, Cout = w_hwio.shape
    assert Cin == C

    if kh == 1 and kw == 1 and padding == 0:
        # 1x1 conv: pure GEMM, no im2col expansion at all.
        if stride > 1:
            x_nhwc = x_nhwc[:, ::stride, ::stride, :]
        Ho, Wo = x_nhwc.shape[1], x_nhwc.shape[2]
        a = x_nhwc.reshape(N * Ho * Wo, C)
        out = pallas_matmul(a, w_hwio.reshape(C, Cout))
        return out.reshape(N, Ho, Wo, Cout)

    # TODO(synk): 3x3/7x7 convs still materialize an im2col A (k*k expansion);
    # an implicit-GEMM Pallas conv (kh/kw folded into the K grid) would remove it.
    Ho = (H + 2 * padding - kh) // stride + 1
    Wo = (W + 2 * padding - kw) // stride + 1
    xp = jnp.pad(x_nhwc, ((0, 0), (padding, padding), (padding, padding), (0, 0)))
    cols = []
    for i in range(kh):
        for j in range(kw):
            patch = lax.slice(
                xp,
                (0, i, j, 0),
                (N, i + (Ho - 1) * stride + 1, j + (Wo - 1) * stride + 1, C),
                (1, stride, stride, 1))
            cols.append(patch)                       # (N, Ho, Wo, C)
    patches = jnp.stack(cols, axis=3)                # (N, Ho, Wo, kh*kw, C)
    a = patches.reshape(N * Ho * Wo, kh * kw * C)
    out = pallas_matmul(a, w_hwio.reshape(kh * kw * C, Cout))
    return out.reshape(N, Ho, Wo, Cout)


def bottleneck(x, blk, stride):
    identity = x
    out = conv2d(x, blk['conv1'], 1, 0)
    out = batchnorm(out, blk['bn1'], relu=True)
    out = conv2d(out, blk['conv2'], stride, 1)
    out = batchnorm(out, blk['bn2'], relu=True)
    out = conv2d(out, blk['conv3'], 1, 0)
    if 'down_conv' in blk:
        identity = conv2d(x, blk['down_conv'], stride, 0)
        identity = batchnorm(identity, blk['down_bn'], relu=False)
    # bn3 + residual add + ReLU fused into one Pallas pass
    return batchnorm_add_relu(out, identity, blk['bn3'])


def forward(params, x_nchw):
    x = jnp.transpose(x_nchw, (0, 2, 3, 1)).astype(jnp.bfloat16)  # NCHW -> NHWC
    x = conv2d(x, params['conv1'], 2, 3)
    x = batchnorm(x, params['bn1'], relu=True)
    # maxpool 3x3 / stride 2 / pad 1  # TODO(synk): window max kept in XLA glue
    x = lax.reduce_window(x, jnp.array(-jnp.inf, x.dtype), lax.max,
                          (1, 3, 3, 1), (1, 2, 2, 1),
                          ((0, 0), (1, 1), (1, 1), (0, 0)))
    for li, blocks in enumerate(params['layers']):
        for bi, blk in enumerate(blocks):
            stride = STRIDES[li] if bi == 0 else 1
            x = bottleneck(x, blk, stride)
    feat = jnp.mean(x.astype(jnp.float32), axis=(1, 2))  # global avg pool -> (N, 2048)
    # fc: Pallas GEMM with the bias fused into the epilogue
    return pallas_matmul(feat, params['fc_w'], bias=params['fc_b'])


# --------------------------- deterministic init -----------------------------

def _make_conv(key, cout, cin, k):
    std = (2.0 / (cin * k * k)) ** 0.5  # kaiming-style
    w = jax.random.normal(key, (cout, cin, k, k), jnp.float32) * std
    # pre-transform once at init: OIHW -> HWIO, bf16 (GEMM B-operand layout)
    return jnp.transpose(w, (2, 3, 1, 0)).astype(jnp.bfloat16)


def _bn_params(c):
    return (jnp.ones((c,), jnp.float32), jnp.zeros((c,), jnp.float32))


def init_params(key):
    keys = iter(jax.random.split(key, 256))
    p = {'conv1': _make_conv(next(keys), 64, 3, 7), 'bn1': _bn_params(64)}
    inplanes = 64
    layers = []
    for nblocks, planes, stride in zip(BLOCKS, PLANES, STRIDES):
        blocks = []
        for bi in range(nblocks):
            s = stride if bi == 0 else 1
            blk = {
                'conv1': _make_conv(next(keys), planes, inplanes, 1),
                'bn1': _bn_params(planes),
                'conv2': _make_conv(next(keys), planes, planes, 3),
                'bn2': _bn_params(planes),
                'conv3': _make_conv(next(keys), planes * EXPANSION, planes, 1),
                'bn3': _bn_params(planes * EXPANSION),
            }
            if s != 1 or inplanes != planes * EXPANSION:
                blk['down_conv'] = _make_conv(next(keys), planes * EXPANSION,
                                              inplanes, 1)
                blk['down_bn'] = _bn_params(planes * EXPANSION)
            blocks.append(blk)
            inplanes = planes * EXPANSION
        layers.append(blocks)
    p['layers'] = layers
    kw_, kb_ = jax.random.split(next(keys))
    bound = 1.0 / (512 * EXPANSION) ** 0.5
    fc_w = jax.random.uniform(kw_, (NUM_CLASSES, 512 * EXPANSION),
                              jnp.float32, -bound, bound)
    p['fc_w'] = jnp.transpose(fc_w).astype(jnp.bfloat16)  # pre-transposed (2048,1000)
    p['fc_b'] = jax.random.uniform(kb_, (NUM_CLASSES,), jnp.float32, -bound, bound)
    return p


# --------------------------------- main -------------------------------------

if __name__ == "__main__":
    root = jax.random.PRNGKey(0)
    pkey, xkey = jax.random.split(root)
    params = init_params(pkey)
    # small input consistent with resnet50's NCHW forward (spatial 32 survives
    # all 5 stride-2 stages: 32 -> 16 -> 8 -> 4 -> 2 -> 1)
    x = jax.random.normal(xkey, (2, 3, 32, 32), jnp.float32)
    logits = forward(params, x)
    logits = jax.block_until_ready(logits)
    assert logits.shape == (2, NUM_CLASSES)
    assert bool(jnp.all(jnp.isfinite(logits)))
    print("KERNEL_OK")
</pallas_src>

<mosaic_0001>
module attributes {stable_mosaic.version = 11 : i64} {
  func.func @_matmul_kernel(%arg0: i32, %arg1: i32, %arg2: i32, %arg3: memref<256x256xbf16, #tpu.memory_space<vmem>>, %arg4: memref<256x64xbf16, #tpu.memory_space<vmem>>, %arg5: memref<256x64xf32, #tpu.memory_space<vmem>>, %arg6: memref<256x64xf32, #tpu.memory_space<vmem>>) attributes {dimension_semantics = [#tpu.dimension_semantics<parallel>, #tpu.dimension_semantics<parallel>, #tpu.dimension_semantics<arbitrary>], iteration_bounds = array<i64: 2, 1, 1>, scalar_prefetch = 0 : i64, scratch_operands = 1 : i64, tpu.core_type = #tpu.core_type<tc>, window_params = [{transform_indices = @transform_0, window_bounds = array<i64: 256, 256>}, {transform_indices = @transform_1, window_bounds = array<i64: 256, 64>}, {transform_indices = @transform_2, window_bounds = array<i64: 256, 64>}]} {
    %c0_i32 = arith.constant 0 : i32
    %0 = arith.cmpi eq, %arg2, %c0_i32 : i32
    %1 = arith.extui %0 : i1 to i32
    %c0_i32_0 = arith.constant 0 : i32
    %2 = arith.cmpi ne, %1, %c0_i32_0 : i32
    scf.if %2 {
      %cst_10 = arith.constant 0.000000e+00 : f32
      %12 = vector.broadcast %cst_10 : f32 to vector<256x64xf32>
      %c0_11 = arith.constant 0 : index
      %c0_12 = arith.constant 0 : index
      %13 = vector.load %arg6[%c0_11, %c0_12] : memref<256x64xf32, #tpu.memory_space<vmem>>, vector<256x64xf32>
      tpu.vector_store %arg6[%c0_11, %c0_12], %12 {strides = array<i32>} : memref<256x64xf32, #tpu.memory_space<vmem>>, vector<256x64xf32>,
    } else {
    }
    %c0 = arith.constant 0 : index
    %c0_1 = arith.constant 0 : index
    %3 = vector.load %arg6[%c0, %c0_1] : memref<256x64xf32, #tpu.memory_space<vmem>>, vector<256x64xf32>
    %c0_2 = arith.constant 0 : index
    %c0_3 = arith.constant 0 : index
    %4 = vector.load %arg3[%c0_2, %c0_3] : memref<256x256xbf16, #tpu.memory_space<vmem>>, vector<256x256xbf16>
    %c0_4 = arith.constant 0 : index
    %c0_5 = arith.constant 0 : index
    %5 = vector.load %arg4[%c0_4, %c0_5] : memref<256x64xbf16, #tpu.memory_space<vmem>>, vector<256x64xbf16>
    %cst = arith.constant dense<0.000000e+00> : vector<256x64xf32>
    %6 = tpu.matmul %4, %5, %cst {dimension_numbers = #tpu.dot_dimension_numbers<[1], [0], [0], [1], [0, 0, 1, 1], [], []>} : vector<256x256xbf16>, vector<256x64xbf16>, vector<256x64xf32> -> vector<256x64xf32>
    %7 = arith.addf %3, %6 : vector<256x64xf32>
    %c0_6 = arith.constant 0 : index
    %c0_7 = arith.constant 0 : index
    %8 = vector.load %arg6[%c0_6, %c0_7] : memref<256x64xf32, #tpu.memory_space<vmem>>, vector<256x64xf32>
    tpu.vector_store %arg6[%c0_6, %c0_7], %7 {strides = array<i32>} : memref<256x64xf32, #tpu.memory_space<vmem>>, vector<256x64xf32>,
    %c0_i32_8 = arith.constant 0 : i32
    %9 = arith.cmpi eq, %arg2, %c0_i32_8 : i32
    %10 = arith.extui %9 : i1 to i32
    %c0_i32_9 = arith.constant 0 : i32
    %11 = arith.cmpi ne, %10, %c0_i32_9 : i32
    scf.if %11 {
      %c0_10 = arith.constant 0 : index
      %c0_11 = arith.constant 0 : index
      %12 = vector.load %arg6[%c0_10, %c0_11] : memref<256x64xf32, #tpu.memory_space<vmem>>, vector<256x64xf32>
      %c0_12 = arith.constant 0 : index
      %c0_13 = arith.constant 0 : index
      %13 = vector.load %arg5[%c0_12, %c0_13] : memref<256x64xf32, #tpu.memory_space<vmem>>, vector<256x64xf32>
      tpu.vector_store %arg5[%c0_12, %c0_13], %12 {strides = array<i32>} : memref<256x64xf32, #tpu.memory_space<vmem>>, vector<256x64xf32>,
    } else {
    }
    return
  }
  func.func @transform_0(%arg0: i32, %arg1: i32, %arg2: i32) -> (i32, i32) {
    %c0_i32 = arith.constant 0 : i32
    return %arg0, %arg2 : i32, i32
  }
  func.func @transform_1(%arg0: i32, %arg1: i32, %arg2: i32) -> (i32, i32) {
    %c0_i32 = arith.constant 0 : i32
    return %arg2, %arg1 : i32, i32
  }
  func.func @transform_2(%arg0: i32, %arg1: i32, %arg2: i32) -> (i32, i32) {
    %c0_i32 = arith.constant 0 : i32
    return %arg0, %arg1 : i32, i32
  }
}

</mosaic_0001>

<llo_original>
// kernel: pallas_matmul.1
$region0: #{pallas_matmul.1}
  #allocation0 [shape = 'u32[]', space=smem, size = 0x4, offset = 0x4, fixed_abs, tag = 'smem constant byte address 0x4 - core index']
  #allocation1 [shape = 'u32[144,128]{1,0:T(1,128)}', space=vmem, size = 0x12000, scoped, tag = 'internal scratch']
  #allocation2 [shape = 'f32[256,64]{1,0:T(8,128)}', space=vmem, size = 0x20000, scoped, tag = 'scratch operand']
  %s0 = inlined_call_operand.vmem [shape: bf16[512,256], index: 0, kind: input, shape index: {}]
  %s1 = inlined_call_operand.vmem [shape: bf16[256,64], index: 1, kind: input, shape index: {}]
  %s2 = inlined_call_operand.vmem [shape: f32[512,64], index: 2, kind: output, shape index: {}]
  %s3 = sld [smem:[#allocation0]]
  $region49: #{pallas_matmul.1} parent=0
    _
  %s5 = ssub.s32 1, %s3
  %s6 = scalar_select 0, %s5, %s3
  loop: start=0, step=1, limit=4
  $region2: #{pallas_matmul.1} parent=0 // loop_pre_header
    _
  $region3: #{pallas_matmul.1} parent=0 // loop_header
    %s8 = sphi 0, %s12
    %p9 = scmp.ge.s32.totalorder %s8, 4
    %s15 = sphi 0, %s34
    %s16 = sphi 0, %s30
    %s17 = sphi 0, %s26
    %s18 = sphi 0, %s15
    %s19 = sphi 0, %s16
    %s20 = sphi 0, %s17
    %s21 = sphi 0, %s18
    %s22 = sphi 0, %s19
    %s23 = sphi 0, %s20
    %s39 = sphi 0, %s41
    %s42 = sphi 0, %s39
    %s43 = sphi 0, %s42
    %s59 = sphi 0, %s43
    %s67 = sphi 0, %s69
    %s70 = sphi 0, %s67
    %s71 = sphi 0, %s70
    %s87 = sphi 0, %s71
    %s95 = sphi 0, %s97
    %s98 = sphi 0, %s95
    %s99 = sphi 0, %s98
    %s115 = sphi 0, %s99
  $region4: #{pallas_matmul.1} parent=0 // loop_header_branch
    %11 = sbr.rel (%p9) target = $region8
  $region5: #{pallas_matmul.1} parent=0 // loop_body
    %s13 = ssub.s32 %s8, 1
    %s14 = ssub.s32 %s8, 2
    %s24 = sadd.s32 1, %s17
    %p25 = scmp.ge.s32.totalorder %s24, 1
    %s26 = scalar_select %p25, 0, %s24
    %s27 = sadd.s32 1, %s16
    %s28 = scalar_select %p25, %s27, %s16
    %p29 = scmp.ge.s32.totalorder %s28, 1
    %s30 = scalar_select %p29, 0, %s28
    %s31 = sadd.s32 1, %s15
    %s32 = scalar_select %p29, %s31, %s15
    %p33 = scmp.ge.s32.totalorder %s32, 2
    %s34 = scalar_select %p33, 0, %s32
    %s35 = ssub.s32 %s15, %s34
    %s36 = ssub.s32 %s17, %s26
    %s37 = sor.u32 %s35, %s36
    %p38 = scmp.eq.s32.totalorder %s37, 0
    %s40 = sadd.s32 %s39, 1
    %s41 = scalar_select %p38, %s39, %s40
    %p44 = pneg %p38
    %p45 = scmp.eq.s32.totalorder %s8, 1
    %p46 = por %p44, %p45
    %p47 = scmp.ne.s32.totalorder %s39, %s42
    %p48 = scmp.eq.s32.totalorder %s8, 0
    %p49 = por %p47, %p48
    %p50 = scmp.ne.s32.totalorder %s39, %s42
    %p51 = scmp.eq.s32.totalorder %s13, 1
    %p52 = por %p50, %p51
    %p53 = scmp.ne.s32.totalorder %s42, %s43
    %p54 = scmp.eq.s32.totalorder %s13, 0
    %p55 = por %p53, %p54
    %p56 = scmp.ne.s32.totalorder %s42, %s43
    %p57 = scmp.eq.s32.totalorder %s14, 1
    %p58 = por %p56, %p57
    %p60 = scmp.ne.s32.totalorder %s43, %s59
    %p61 = scmp.eq.s32.totalorder %s14, 0
    %p62 = por %p60, %p61
    %s63 = ssub.s32 %s17, %s26
    %s64 = ssub.s32 %s16, %s30
    %s65 = sor.u32 %s63, %s64
    %p66 = scmp.eq.s32.totalorder %s65, 0
    %s68 = sadd.s32 %s67, 1
    %s69 = scalar_select %p66, %s67, %s68
    %p72 = pneg %p66
    %p73 = scmp.eq.s32.totalorder %s8, 1
    %p74 = por %p72, %p73
    %p75 = scmp.ne.s32.totalorder %s67, %s70
    %p76 = scmp.eq.s32.totalorder %s8, 0
    %p77 = por %p75, %p76
    %p78 = scmp.ne.s32.totalorder %s67, %s70
    %p79 = scmp.eq.s32.totalorder %s13, 1
    %p80 = por %p78, %p79
    %p81 = scmp.ne.s32.totalorder %s70, %s71
    %p82 = scmp.eq.s32.totalorder %s13, 0
    %p83 = por %p81, %p82
    %p84 = scmp.ne.s32.totalorder %s70, %s71
    %p85 = scmp.eq.s32.totalorder %s14, 1
    %p86 = por %p84, %p85
    %p88 = scmp.ne.s32.totalorder %s71, %s87
    %p89 = scmp.eq.s32.totalorder %s14, 0
    %p90 = por %p88, %p89
    %s91 = ssub.s32 %s15, %s34
    %s92 = ssub.s32 %s16, %s30
    %s93 = sor.u32 %s91, %s92
    %p94 = scmp.eq.s32.totalorder %s93, 0
    %s96 = sadd.s32 %s95, 1
    %s97 = scalar_select %p94, %s95, %s96
    %p100 = pneg %p94
    %p101 = scmp.eq.s32.totalorder %s8, 1
    %p102 = por %p100, %p101
    %p103 = scmp.ne.s32.totalorder %s95, %s98
    %p104 = scmp.eq.s32.totalorder %s8, 0
    %p105 = por %p103, %p104
    %p106 = scmp.ne.s32.totalorder %s95, %s98
    %p107 = scmp.eq.s32.totalorder %s13, 1
    %p108 = por %p106, %p107
    %p109 = scmp.ne.s32.totalorder %s98, %s99
    %p110 = scmp.eq.s32.totalorder %s13, 0
    %p111 = por %p109, %p110
    %p112 = scmp.ne.s32.totalorder %s98, %s99
    %p113 = scmp.eq.s32.totalorder %s14, 1
    %p114 = por %p112, %p113
    %p116 = scmp.ne.s32.totalorder %s99, %s115
    %p117 = scmp.eq.s32.totalorder %s14, 0
    %p118 = por %p116, %p117
    %p119 = scmp.le.s32.totalorder 1, %s8
    %p120 = scmp.lt.s32.totalorder %s8, 3
    %p121 = pnand %p119, %p120
    %p122 = pneg %p121
    // Predicated region
    $region9: #{pallas_matmul.1} parent=5 // pred_check
      _
    $region10: #{pallas_matmul.1} parent=5 // pred_check_branch
      %124 = sbr.rel (%p121) target = $region12
    $region11: #{pallas_matmul.1} parent=5 // pred_region
      %s125 = ssub.s32 %s8, 1
      // Predicated region
      $region13: #{pallas_matmul.1} parent=11 // pred_check
        %p126 = pneg %p83
      $region14: #{pallas_matmul.1} parent=11 // pred_check_branch
        %128 = sbr.rel (%p126) target = $region16
      $region15: #{pallas_matmul.1} parent=11 // pred_region
        %s129 = smul.u32 32, %s20
        %p130 = scmp.lt.s32.totalorder %s129, 31
        %s131 = scalar_select %p130, %s129, 31
        %p132 = scmp.lt.s32.totalorder %s19, 0
        %s133 = scalar_select %p132, %s19, 0
        %s134 = sadd.s32 %s133, %s131
        %s135 = smul.addr %s134, 4
        %s136 = scalar_lea.vmem %s1, %s135
        %s137 = smul.u32 32, %s20
      $region16: #{pallas_matmul.1} parent=11 // pred_fallthru
        _
    $region12: #{pallas_matmul.1} parent=5 // pred_fallthru
      _
    %p138 = scmp.lt.s32.totalorder %s8, 2
    // Predicated region
    $region17: #{pallas_matmul.1} parent=5 // pred_check
      %p139 = pneg %p138
    $region18: #{pallas_matmul.1} parent=5 // pred_check_branch
      %141 = sbr.rel (%p139) target = $region20
    $region19: #{pallas_matmul.1} parent=5 // pred_region
      // Predicated region
      $region21: #{pallas_matmul.1} parent=19 // pred_check
        %p142 = pneg %p49
      $region22: #{pallas_matmul.1} parent=19 // pred_check_branch
        %144 = sbr.rel (%p142) target = $region24
      $region23: #{pallas_matmul.1} parent=19 // pred_region
        %s145 = smul.u32 32, %s15
        %s146 = smul.u32 2, %s17
        %p147 = scmp.lt.s32.totalorder %s145, 63
        %s148 = scalar_select %p147, %s145, 63
        %p149 = scmp.lt.s32.totalorder %s146, 1
        %s150 = scalar_select %p149, %s146, 1
        %s151 = smul.addr %s148, 2
        %s152 = sadd.s32 %s150, %s151
        %s153 = smul.addr %s152, 4
        %s154 = scalar_lea.vmem %s0, %s153
        %s155 = smul.u32 32, %s15
        %s156 = smul.u32 2, %s17
      $region24: #{pallas_matmul.1} parent=19 // pred_fallthru
        _
    $region20: #{pallas_matmul.1} parent=5 // pred_fallthru
      _
    %p157 = scmp.le.s32.totalorder 1, %s8
    %p158 = scmp.lt.s32.totalorder %s8, 3
    %p159 = pnand %p157, %p158
    %p160 = pneg %p159
    // Predicated region
    $region25: #{pallas_matmul.1} parent=5 // pred_check
      _
    $region26: #{pallas_matmul.1} parent=5 // pred_check_branch
      %162 = sbr.rel (%p159) target = $region28
    $region27: #{pallas_matmul.1} parent=5 // pred_region
      %s163 = ssub.s32 %s8, 1
      %s164 = smul.u32 32, %s18
      %s165 = smul.u32 2, %s20
      %p166 = scmp.lt.s32.totalorder %s164, 63
      %s167 = scalar_select %p166, %s164, 63
      %p168 = scmp.lt.s32.totalorder %s165, 1
      %s169 = scalar_select %p168, %s165, 1
      %s170 = smul.addr %s167, 2
      %s171 = sadd.s32 %s169, %s170
      %s172 = smul.addr %s171, 4
      %s173 = scalar_lea.vmem %s0, %s172
      %p174 = pneg %p55
      %p175 = pneg %p52
      %s176 = smul.u32 32, %s20
      %p177 = scmp.lt.s32.totalorder %s176, 31
      %s178 = scalar_select %p177, %s176, 31
      %p179 = scmp.lt.s32.totalorder %s19, 0
      %s180 = scalar_select %p179, %s19, 0
      %s181 = sadd.s32 %s180, %s178
      %s182 = smul.addr %s181, 4
      %s183 = scalar_lea.vmem %s1, %s182
      %p184 = pneg %p83
      %p185 = pneg %p80
      %p186 = pneg %p111
      %p187 = pneg %p108
      %s188 = smul.u32 32, %s18
      %p189 = scmp.lt.s32.totalorder %s188, 63
      %s190 = scalar_select %p189, %s188, 63
      %p191 = scmp.lt.s32.totalorder %s19, 0
      %s192 = scalar_select %p191, %s19, 0
      %s193 = sadd.s32 %s192, %s190
      %s194 = smul.addr %s193, 8
      %s195 = scalar_lea.vmem %s2, %s194
      %s196 = smul.u32 32, %s18
      %s197 = smul.u32 2, %s20
      %p198 = scmp.lt.s32.totalorder %s196, 63
      %s199 = scalar_select %p198, %s196, 63
      %p200 = scmp.lt.s32.totalorder %s197, 1
      %s201 = scalar_select %p200, %s197, 1
      %s202 = smul.addr %s199, 2
      %s203 = sadd.s32 %s201, %s202
      %s204 = smul.addr %s203, 4
      %s205 = scalar_lea.vmem %s0, %s204
      %s206 = smul.u32 32, %s18
      %s207 = smul.u32 2, %s20
      %s208 = smul.u32 32, %s20
      %p209 = scmp.lt.s32.totalorder %s208, 31
      %s210 = scalar_select %p209, %s208, 31
      %p211 = scmp.lt.s32.totalorder %s19, 0
      %s212 = scalar_select %p211, %s19, 0
      %s213 = sadd.s32 %s212, %s210
      %s214 = smul.addr %s213, 4
      %s215 = scalar_lea.vmem %s1, %s214
      %s216 = smul.u32 32, %s20
      %s217 = smul.u32 32, %s18
      %p218 = scmp.lt.s32.totalorder %s217, 63
      %s219 = scalar_select %p218, %s217, 63
      %p220 = scmp.lt.s32.totalorder %s19, 0
      %s221 = scalar_select %p220, %s19, 0
      %s222 = sadd.s32 %s221, %s219
      %s223 = smul.addr %s222, 8
      %s224 = scalar_lea.vmem %s2, %s223
      %s225 = smul.u32 32, %s18
      %p227 = scmp.eq.s32.totalorder %s20, 0
      // Predicated region
      $region29: #{pallas_matmul.1} parent=27 // pred_check
        %p228 = pneg %p227
      $region30: #{pallas_matmul.1} parent=27 // pred_check_branch
        %230 = sbr.rel (%p228) target = $region32
      $region31: #{pallas_matmul.1} parent=27 // pred_region
        %vm231 = vcmask 523264
        %232 = vst.msk [vmem:[#allocation2] sm:$0xff] %vm231, 0.0
        %233 = vst.msk [vmem:[#allocation2 + $0x8] sm:$0xff] %vm231, 0.0
        %234 = vst.msk [vmem:[#allocation2 + $0x10] sm:$0xff] %vm231, 0.0
        %235 = vst.msk [vmem:[#allocation2 + $0x18] sm:$0xff] %vm231, 0.0
        %236 = vst.msk [vmem:[#allocation2 + $0x20] sm:$0xff] %vm231, 0.0
        %237 = vst.msk [vmem:[#allocation2 + $0x28] sm:$0xff] %vm231, 0.0
        %238 = vst.msk [vmem:[#allocation2 + $0x30] sm:$0xff] %vm231, 0.0
        %239 = vst.msk [vmem:[#allocation2 + $0x38] sm:$0xff] %vm231, 0.0
        %240 = vst.msk [vmem:[#allocation2 + $0x40] sm:$0xff] %vm231, 0.0
        %241 = vst.msk [vmem:[#allocation2 + $0x48] sm:$0xff] %vm231, 0.0
        %242 = vst.msk [vmem:[#allocation2 + $0x50] sm:$0xff] %vm231, 0.0
        %243 = vst.msk [vmem:[#allocation2 + $0x58] sm:$0xff] %vm231, 0.0
        %244 = vst.msk [vmem:[#allocation2 + $0x60] sm:$0xff] %vm231, 0.0
        %245 = vst.msk [vmem:[#allocation2 + $0x68] sm:$0xff] %vm231, 0.0
        %246 = vst.msk [vmem:[#allocation2 + $0x70] sm:$0xff] %vm231, 0.0
        %247 = vst.msk [vmem:[#allocation2 + $0x78] sm:$0xff] %vm231, 0.0
        %248 = vst.msk [vmem:[#allocation2 + $0x80] sm:$0xff] %vm231, 0.0
        %249 = vst.msk [vmem:[#allocation2 + $0x88] sm:$0xff] %vm231, 0.0
        %250 = vst.msk [vmem:[#allocation2 + $0x90] sm:$0xff] %vm231, 0.0
        %251 = vst.msk [vmem:[#allocation2 + $0x98] sm:$0xff] %vm231, 0.0
        %252 = vst.msk [vmem:[#allocation2 + $0xa0] sm:$0xff] %vm231, 0.0
        %253 = vst.msk [vmem:[#allocation2 + $0xa8] sm:$0xff] %vm231, 0.0
        %254 = vst.msk [vmem:[#allocation2 + $0xb0] sm:$0xff] %vm231, 0.0
        %255 = vst.msk [vmem:[#allocation2 + $0xb8] sm:$0xff] %vm231, 0.0
        %256 = vst.msk [vmem:[#allocation2 + $0xc0] sm:$0xff] %vm231, 0.0
        %257 = vst.msk [vmem:[#allocation2 + $0xc8] sm:$0xff] %vm231, 0.0
        %258 = vst.msk [vmem:[#allocation2 + $0xd0] sm:$0xff] %vm231, 0.0
        %259 = vst.msk [vmem:[#allocation2 + $0xd8] sm:$0xff] %vm231, 0.0
        %260 = vst.msk [vmem:[#allocation2 + $0xe0] sm:$0xff] %vm231, 0.0
        %261 = vst.msk [vmem:[#allocation2 + $0xe8] sm:$0xff] %vm231, 0.0
        %262 = vst.msk [vmem:[#allocation2 + $0xf0] sm:$0xff] %vm231, 0.0
        %263 = vst.msk [vmem:[#allocation2 + $0xf8] sm:$0xff] %vm231, 0.0
      $region32: #{pallas_matmul.1} parent=27 // pred_fallthru
        _
      %v264 = vld [vmem:[#allocation2] sm:$0xff]
      %v265 = vld [vmem:[#allocation2 + $0x8] sm:$0xff]
      %v266 = vld [vmem:[#allocation2 + $0x10] sm:$0xff]
      %v267 = vld [vmem:[#allocation2 + $0x18] sm:$0xff]
      %v268 = vld [vmem:[#allocation2 + $0x20] sm:$0xff]
      %v269 = vld [vmem:[#allocation2 + $0x28] sm:$0xff]
      %v270 = vld [vmem:[#allocation2 + $0x30] sm:$0xff]
      %v271 = vld [vmem:[#allocation2 + $0x38] sm:$0xff]
      %v272 = vld [vmem:[#allocation2 + $0x40] sm:$0xff]
      %v273 = vld [vmem:[#allocation2 + $0x48] sm:$0xff]
      %v274 = vld [vmem:[#allocation2 + $0x50] sm:$0xff]
      %v275 = vld [vmem:[#allocation2 + $0x58] sm:$0xff]
      %v276 = vld [vmem:[#allocation2 + $0x60] sm:$0xff]
      %v277 = vld [vmem:[#allocation2 + $0x68] sm:$0xff]
      %v278 = vld [vmem:[#allocation2 + $0x70] sm:$0xff]
      %v279 = vld [vmem:[#allocation2 + $0x78] sm:$0xff]
      %v280 = vld [vmem:[#allocation2 + $0x80] sm:$0xff]
      %v281 = vld [vmem:[#allocation2 + $0x88] sm:$0xff]
      %v282 = vld [vmem:[#allocation2 + $0x90] sm:$0xff]
      %v283 = vld [vmem:[#allocation2 + $0x98] sm:$0xff]
      %v284 = vld [vmem:[#allocation2 + $0xa0] sm:$0xff]
      %v285 = vld [vmem:[#allocation2 + $0xa8] sm:$0xff]
      %v286 = vld [vmem:[#allocation2 + $0xb0] sm:$0xff]
      %v287 = vld [vmem:[#allocation2 + $0xb8] sm:$0xff]
      %v288 = vld [vmem:[#allocation2 + $0xc0] sm:$0xff]
      %v289 = vld [vmem:[#allocation2 + $0xc8] sm:$0xff]
      %v290 = vld [vmem:[#allocation2 + $0xd0] sm:$0xff]
      %v291 = vld [vmem:[#allocation2 + $0xd8] sm:$0xff]
      %v292 = vld [vmem:[#allocation2 + $0xe0] sm:$0xff]
      %v293 = vld [vmem:[#allocation2 + $0xe8] sm:$0xff]
      %v294 = vld [vmem:[#allocation2 + $0xf0] sm:$0xff]
      %v295 = vld [vmem:[#allocation2 + $0xf8] sm:$0xff]
      %v296 = vld [vmem:[%s205] sm:$0xff]
      %v297 = vld [vmem:[%s205 + $0x8] sm:$0xff]
      %v298 = vld [vmem:[%s205 + $0x10] sm:$0xff]
      %v299 = vld [vmem:[%s205 + $0x18] sm:$0xff]
      %v300 = vld [vmem:[%s205 + $0x20] sm:$0xff]
      %v301 = vld [vmem:[%s205 + $0x28] sm:$0xff]
      %v302 = vld [vmem:[%s205 + $0x30] sm:$0xff]
      %v303 = vld [vmem:[%s205 + $0x38] sm:$0xff]
      %v304 = vld [vmem:[%s205 + $0x40] sm:$0xff]
      %v305 = vld [vmem:[%s205 + $0x48] sm:$0xff]
      %v306 = vld [vmem:[%s205 + $0x50] sm:$0xff]
      %v307 = vld [vmem:[%s205 + $0x58] sm:$0xff]
      %v308 = vld [vmem:[%s205 + $0x60] sm:$0xff]
      %v309 = vld [vmem:[%s205 + $0x68] sm:$0xff]
      %v310 = vld [vmem:[%s205 + $0x70] sm:$0xff]
      %v311 = vld [vmem:[%s205 + $0x78] sm:$0xff]
      %v312 = vld [vmem:[%s205 + $0x80] sm:$0xff]
      %v313 = vld [vmem:[%s205 + $0x88] sm:$0xff]
      %v314 = vld [vmem:[%s205 + $0x90] sm:$0xff]
      %v315 = vld [vmem:[%s205 + $0x98] sm:$0xff]
      %v316 = vld [vmem:[%s205 + $0xa0] sm:$0xff]
      %v317 = vld [vmem:[%s205 + $0xa8] sm:$0xff]
      %v318 = vld [vmem:[%s205 + $0xb0] sm:$0xff]
      %v319 = vld [vmem:[%s205 + $0xb8] sm:$0xff]
      %v320 = vld [vmem:[%s205 + $0xc0] sm:$0xff]
      %v321 = vld [vmem:[%s205 + $0xc8] sm:$0xff]
      %v322 = vld [vmem:[%s205 + $0xd0] sm:$0xff]
      %v323 = vld [vmem:[%s205 + $0xd8] sm:$0xff]
      %v324 = vld [vmem:[%s205 + $0xe0] sm:$0xff]
      %v325 = vld [vmem:[%s205 + $0xe8] sm:$0xff]
      %v326 = vld [vmem:[%s205 + $0xf0] sm:$0xff]
      %v327 = vld [vmem:[%s205 + $0xf8] sm:$0xff]
      %v328 = vld [vmem:[%s215] sm:$0xf]
      %v329 = vld [vmem:[%s215 + $0x4] sm:$0xf]
      %v330 = vld [vmem:[%s215 + $0x8] sm:$0xf]
      %v331 = vld [vmem:[%s215 + $0xc] sm:$0xf]
      %v332 = vld [vmem:[%s215 + $0x10] sm:$0xf]
      %v333 = vld [vmem:[%s215 + $0x14] sm:$0xf]
      %v334 = vld [vmem:[%s215 + $0x18] sm:$0xf]
      %v335 = vld [vmem:[%s215 + $0x1c] sm:$0xf]
      %v336 = vld [vmem:[%s215 + $0x20] sm:$0xf]
      %v337 = vld [vmem:[%s215 + $0x24] sm:$0xf]
      %v338 = vld [vmem:[%s215 + $0x28] sm:$0xf]
      %v339 = vld [vmem:[%s215 + $0x2c] sm:$0xf]
      %v340 = vld [vmem:[%s215 + $0x30] sm:$0xf]
      %v341 = vld [vmem:[%s215 + $0x34] sm:$0xf]
      %v342 = vld [vmem:[%s215 + $0x38] sm:$0xf]
      %v343 = vld [vmem:[%s215 + $0x3c] sm:$0xf]
      %v344 = vld [vmem:[%s215 + $0x40] sm:$0xf]
      %v345 = vld [vmem:[%s215 + $0x44] sm:$0xf]
      %v346 = vld [vmem:[%s215 + $0x48] sm:$0xf]
      %v347 = vld [vmem:[%s215 + $0x4c] sm:$0xf]
      %v348 = vld [vmem:[%s215 + $0x50] sm:$0xf]
      %v349 = vld [vmem:[%s215 + $0x54] sm:$0xf]
      %v350 = vld [vmem:[%s215 + $0x58] sm:$0xf]
      %v351 = vld [vmem:[%s215 + $0x5c] sm:$0xf]
      %v352 = vld [vmem:[%s215 + $0x60] sm:$0xf]
      %v353 = vld [vmem:[%s215 + $0x64] sm:$0xf]
      %v354 = vld [vmem:[%s215 + $0x68] sm:$0xf]
      %v355 = vld [vmem:[%s215 + $0x6c] sm:$0xf]
      %v356 = vld [vmem:[%s215 + $0x70] sm:$0xf]
      %v357 = vld [vmem:[%s215 + $0x74] sm:$0xf]
      %v358 = vld [vmem:[%s215 + $0x78] sm:$0xf]
      %v359 = vld [vmem:[%s215 + $0x7c] sm:$0xf]
      %v392 = vunpack.c.l.b16 %v296
      %v393 = vunpack.c.h.b16 %v296
      %v394 = vunpack.c.l.b16 %v297
      %v395 = vunpack.c.h.b16 %v297
      %v396 = vunpack.c.l.b16 %v298
      %v397 = vunpack.c.h.b16 %v298
      %v398 = vunpack.c.l.b16 %v299
      %v399 = vunpack.c.h.b16 %v299
      %v400 = vunpack.c.l.b16 %v300
      %v401 = vunpack.c.h.b16 %v300
      %v402 = vunpack.c.l.b16 %v301
      %v403 = vunpack.c.h.b16 %v301
      %v404 = vunpack.c.l.b16 %v302
      %v405 = vunpack.c.h.b16 %v302
      %v406 = vunpack.c.l.b16 %v303
      %v407 = vunpack.c.h.b16 %v303
      %v408 = vunpack.c.l.b16 %v304
      %v409 = vunpack.c.h.b16 %v304
      %v410 = vunpack.c.l.b16 %v305
      %v411 = vunpack.c.h.b16 %v305
      %v412 = vunpack.c.l.b16 %v306
      %v413 = vunpack.c.h.b16 %v306
      %v414 = vunpack.c.l.b16 %v307
      %v415 = vunpack.c.h.b16 %v307
      %v416 = vunpack.c.l.b16 %v308
      %v417 = vunpack.c.h.b16 %v308
      %v418 = vunpack.c.l.b16 %v309
      %v419 = vunpack.c.h.b16 %v309
      %v420 = vunpack.c.l.b16 %v310
      %v421 = vunpack.c.h.b16 %v310
      %v422 = vunpack.c.l.b16 %v311
      %v423 = vunpack.c.h.b16 %v311
      %v424 = vunpack.c.l.b16 %v312
      %v425 = vunpack.c.h.b16 %v312
      %v426 = vunpack.c.l.b16 %v313
      %v427 = vunpack.c.h.b16 %v313
      %v428 = vunpack.c.l.b16 %v314
      %v429 = vunpack.c.h.b16 %v314
      %v430 = vunpack.c.l.b16 %v315
      %v431 = vunpack.c.h.b16 %v315
      %v432 = vunpack.c.l.b16 %v316
      %v433 = vunpack.c.h.b16 %v316
      %v434 = vunpack.c.l.b16 %v317
      %v435 = vunpack.c.h.b16 %v317
      %v436 = vunpack.c.l.b16 %v318
      %v437 = vunpack.c.h.b16 %v318
      %v438 = vunpack.c.l.b16 %v319
      %v439 = vunpack.c.h.b16 %v319
      %v440 = vunpack.c.l.b16 %v320
      %v441 = vunpack.c.h.b16 %v320
      %v442 = vunpack.c.l.b16 %v321
      %v443 = vunpack.c.h.b16 %v321
      %v444 = vunpack.c.l.b16 %v322
      %v445 = vunpack.c.h.b16 %v322
      %v446 = vunpack.c.l.b16 %v323
      %v447 = vunpack.c.h.b16 %v323
      %v448 = vunpack.c.l.b16 %v324
      %v449 = vunpack.c.h.b16 %v324
      %v450 = vunpack.c.l.b16 %v325
      %v451 = vunpack.c.h.b16 %v325
      %v452 = vunpack.c.l.b16 %v326
      %v453 = vunpack.c.h.b16 %v326
      %v454 = vunpack.c.l.b16 %v327
      %v455 = vunpack.c.h.b16 %v327
      %v456 = vpack.c.b16 %v394, %v392
      %v457 = vpack.c.b16 %v395, %v393
      %v458 = vpack.c.b16 %v398, %v396
      %v459 = vpack.c.b16 %v399, %v397
      %v460 = vpack.c.b16 %v402, %v400
      %v461 = vpack.c.b16 %v403, %v401
      %v462 = vpack.c.b16 %v406, %v404
      %v463 = vpack.c.b16 %v407, %v405
      %v464 = vpack.c.b16 %v410, %v408
      %v465 = vpack.c.b16 %v411, %v409
      %v466 = vpack.c.b16 %v414, %v412
      %v467 = vpack.c.b16 %v415, %v413
      %v468 = vpack.c.b16 %v418, %v416
      %v469 = vpack.c.b16 %v419, %v417
      %v470 = vpack.c.b16 %v422, %v420
      %v471 = vpack.c.b16 %v423, %v421
      %v472 = vpack.c.b16 %v426, %v424
      %v473 = vpack.c.b16 %v427, %v425
      %v474 = vpack.c.b16 %v430, %v428
      %v475 = vpack.c.b16 %v431, %v429
      %v476 = vpack.c.b16 %v434, %v432
      %v477 = vpack.c.b16 %v435, %v433
      %v478 = vpack.c.b16 %v438, %v436
      %v479 = vpack.c.b16 %v439, %v437
      %v480 = vpack.c.b16 %v442, %v440
      %v481 = vpack.c.b16 %v443, %v441
      %v482 = vpack.c.b16 %v446, %v444
      %v483 = vpack.c.b16 %v447, %v445
      %v484 = vpack.c.b16 %v450, %v448
      %v485 = vpack.c.b16 %v451, %v449
      %v486 = vpack.c.b16 %v454, %v452
      %v487 = vpack.c.b16 %v455, %v453
      %v552 = vunpack.c.l.b16 %v328
      %v553 = vunpack.c.l.b16 %v329
      %v554 = vunpack.c.l.b16 %v330
      %v555 = vunpack.c.l.b16 %v331
      %v556 = vunpack.c.l.b16 %v332
      %v557 = vunpack.c.l.b16 %v333
      %v558 = vunpack.c.l.b16 %v334
      %v559 = vunpack.c.l.b16 %v335
      %v560 = vunpack.c.l.b16 %v336
      %v561 = vunpack.c.l.b16 %v337
      %v562 = vunpack.c.l.b16 %v338
      %v563 = vunpack.c.l.b16 %v339
      %v564 = vunpack.c.l.b16 %v340
      %v565 = vunpack.c.l.b16 %v341
      %v566 = vunpack.c.l.b16 %v342
      %v567 = vunpack.c.l.b16 %v343
      %v568 = vunpack.c.l.b16 %v344
      %v569 = vunpack.c.l.b16 %v345
      %v570 = vunpack.c.l.b16 %v346
      %v571 = vunpack.c.l.b16 %v347
      %v572 = vunpack.c.l.b16 %v348
      %v573 = vunpack.c.l.b16 %v349
      %v574 = vunpack.c.l.b16 %v350
      %v575 = vunpack.c.l.b16 %v351
      %v576 = vunpack.c.l.b16 %v352
      %v577 = vunpack.c.l.b16 %v353
      %v578 = vunpack.c.l.b16 %v354
      %v579 = vunpack.c.l.b16 %v355
      %v580 = vunpack.c.l.b16 %v356
      %v581 = vunpack.c.l.b16 %v357
      %v582 = vunpack.c.l.b16 %v358
      %v583 = vunpack.c.l.b16 %v359
      %v584 = vpack.c.b16 %v553, %v552
      %v585 = vpack.c.b16 %v555, %v554
      %v586 = vpack.c.b16 %v557, %v556
      %v587 = vpack.c.b16 %v559, %v558
      %v588 = vpack.c.b16 %v561, %v560
      %v589 = vpack.c.b16 %v563, %v562
      %v590 = vpack.c.b16 %v565, %v564
      %v591 = vpack.c.b16 %v567, %v566
      %v592 = vpack.c.b16 %v569, %v568
      %v593 = vpack.c.b16 %v571, %v570
      %v594 = vpack.c.b16 %v573, %v572
      %v595 = vpack.c.b16 %v575, %v574
      %v596 = vpack.c.b16 %v577, %v576
      %v597 = vpack.c.b16 %v579, %v578
      %v598 = vpack.c.b16 %v581, %v580
      %v599 = vpack.c.b16 %v583, %v582
      %616 = vmatprep.subr.bf16.mxu0 0
      %617 = vmatpush1.bf16.msra.mxu0 %v584
      %618 = vmatprep.subr.bf16.mxu0 0
      %619 = vmatpush1.bf16.msra.mxu0 %v585
      %620 = vmatprep.subr.bf16.mxu0 0
      %621 = vmatpush1.bf16.msra.mxu0 %v586
      %622 = vmatprep.subr.bf16.mxu0 0
      %623 = vmatpush1.bf16.msra.mxu0 %v587
      %624 = vmatprep.subr.bf16.mxu0 0
      %625 = vmatpush1.bf16.msra.mxu0 %v588
      %626 = vmatprep.subr.bf16.mxu0 0
      %627 = vmatpush1.bf16.msra.mxu0 %v589
      %628 = vmatprep.subr.bf16.mxu0 0
      %629 = vmatpush1.bf16.msra.mxu0 %v590
      %630 = vmatprep.subr.bf16.mxu0 0
      %631 = vmatpush1.bf16.msra.mxu0 %v591
      %632 = vmatprep.subr.bf16.mxu0 0
      %633 = vmatpush1.bf16.msra.mxu0 %v592
      %634 = vmatprep.subr.bf16.mxu0 0
      %635 = vmatpush1.bf16.msra.mxu0 %v593
      %636 = vmatprep.subr.bf16.mxu0 0
      %637 = vmatpush1.bf16.msra.mxu0 %v594
      %638 = vmatprep.subr.bf16.mxu0 0
      %639 = vmatpush1.bf16.msra.mxu0 %v595
      %640 = vmatprep.subr.bf16.mxu0 0
      %641 = vmatpush1.bf16.msra.mxu0 %v596
      %642 = vmatprep.subr.bf16.mxu0 0
      %643 = vmatpush1.bf16.msra.mxu0 %v597
      %644 = vmatprep.subr.bf16.mxu0 0
      %645 = vmatpush1.bf16.msra.mxu0 %v598
      %646 = vmatprep.subr.bf16.mxu0 0
      %647 = vmatpush1.bf16.msra.mxu0 %v599
      %648 = vmatprep.mubr.bf16.mxu0 %v457
      %649 = vmatmul.mubr.bf16.gmra.mrb[0].mxu0 %v456
      %v650 = vpop.f32.mrb[0].mxu0
      %v651 = vadd.f32 0.0, %v650
      %v652 = vpop.f32.mrb[0].mxu0
      %v653 = vpop.f32.mrb[0].mxu0
      %v654 = vadd.f32 0.0, %v653
      %v655 = vpop.f32.mrb[0].mxu0
      %656 = vmatprep.mubr.bf16.mxu0 %v459
      %657 = vmatmul.mubr.bf16.gmra.mrb[0].mxu0 %v458
      %v658 = vpop.f32.mrb[0].mxu0
      %v659 = vadd.f32 0.0, %v658
      %v660 = vpop.f32.mrb[0].mxu0
      %v661 = vpop.f32.mrb[0].mxu0
      %v662 = vadd.f32 0.0, %v661
      %v663 = vpop.f32.mrb[0].mxu0
      %664 = vmatprep.mubr.bf16.mxu0 %v461
      %665 = vmatmul.mubr.bf16.gmra.mrb[0].mxu0 %v460
      %v666 = vpop.f32.mrb[0].mxu0
      %v667 = vadd.f32 0.0, %v666
      %v668 = vpop.f32.mrb[0].mxu0
      %v669 = vpop.f32.mrb[0].mxu0
      %v670 = vadd.f32 0.0, %v669
      %v671 = vpop.f32.mrb[0].mxu0
      %672 = vmatprep.mubr.bf16.mxu0 %v463
      %673 = vmatmul.mubr.bf16.gmra.mrb[0].mxu0 %v462
      %v674 = vpop.f32.mrb[0].mxu0
      %v675 = vadd.f32 0.0, %v674
      %v676 = vpop.f32.mrb[0].mxu0
      %v677 = vpop.f32.mrb[0].mxu0
      %v678 = vadd.f32 0.0, %v677
      %v679 = vpop.f32.mrb[0].mxu0
      %680 = vmatprep.mubr.bf16.mxu0 %v465
      %681 = vmatmul.mubr.bf16.gmra.mrb[0].mxu0 %v464
      %v682 = vpop.f32.mrb[0].mxu0
      %v683 = vadd.f32 0.0, %v682
      %v684 = vpop.f32.mrb[0].mxu0
      %v685 = vpop.f32.mrb[0].mxu0
      %v686 = vadd.f32 0.0, %v685
      %v687 = vpop.f32.mrb[0].mxu0
      %688 = vmatprep.mubr.bf16.mxu0 %v467
      %689 = vmatmul.mubr.bf16.gmra.mrb[0].mxu0 %v466
      %v690 = vpop.f32.mrb[0].mxu0
      %v691 = vadd.f32 0.0, %v690
      %v692 = vpop.f32.mrb[0].mxu0
      %v693 = vpop.f32.mrb[0].mxu0
      %v694 = vadd.f32 0.0, %v693
      %v695 = vpop.f32.mrb[0].mxu0
      %696 = vmatprep.mubr.bf16.mxu0 %v469
      %697 = vmatmul.mubr.bf16.gmra.mrb[0].mxu0 %v468
      %v698 = vpop.f32.mrb[0].mxu0
      %v699 = vadd.f32 0.0, %v698
      %v700 = vpop.f32.mrb[0].mxu0
      %v701 = vpop.f32.mrb[0].mxu0
      %v702 = vadd.f32 0.0, %v701
      %v703 = vpop.f32.mrb[0].mxu0
      %704 = vmatprep.mubr.bf16.mxu0 %v471
      %705 = vmatmul.mubr.bf16.gmra.mrb[0].mxu0 %v470
      %v706 = vpop.f32.mrb[0].mxu0
      %v707 = vadd.f32 0.0, %v706
      %v708 = vpop.f32.mrb[0].mxu0
      %v709 = vpop.f32.mrb[0].mxu0
      %v710 = vadd.f32 0.0, %v709
      %v711 = vpop.f32.mrb[0].mxu0
      %712 = vmatprep.mubr.bf16.mxu0 %v473
      %713 = vmatmul.mubr.bf16.gmra.mrb[0].mxu0 %v472
      %v714 = vpop.f32.mrb[0].mxu0
      %v715 = vadd.f32 0.0, %v714
      %v716 = vpop.f32.mrb[0].mxu0
      %v717 = vpop.f32.mrb[0].mxu0
      %v718 = vadd.f32 0.0, %v717
      %v719 = vpop.f32.mrb[0].mxu0
      %720 = vmatprep.mubr.bf16.mxu0 %v475
      %721 = vmatmul.mubr.bf16.gmra.mrb[0].mxu0 %v474
      %v722 = vpop.f32.mrb[0].mxu0
      %v723 = vadd.f32 0.0, %v722
      %v724 = vpop.f32.mrb[0].mxu0
      %v725 = vpop.f32.mrb[0].mxu0
      %v726 = vadd.f32 0.0, %v725
      %v727 = vpop.f32.mrb[0].mxu0
      %728 = vmatprep.mubr.bf16.mxu0 %v477
      %729 = vmatmul.mubr.bf16.gmra.mrb[0].mxu0 %v476
      %v730 = vpop.f32.mrb[0].mxu0
      %v731 = vadd.f32 0.0, %v730
      %v732 = vpop.f32.mrb[0].mxu0
      %v733 = vpop.f32.mrb[0].mxu0
      %v734 = vadd.f32 0.0, %v733
      %v735 = vpop.f32.mrb[0].mxu0
      %736 = vmatprep.mubr.bf16.mxu0 %v479
      %737 = vmatmul.mubr.bf16.gmra.mrb[0].mxu0 %v478
      %v738 = vpop.f32.mrb[0].mxu0
      %v739 = vadd.f32 0.0, %v738
      %v740 = vpop.f32.mrb[0].mxu0
      %v741 = vpop.f32.mrb[0].mxu0
      %v742 = vadd.f32 0.0, %v741
      %v743 = vpop.f32.mrb[0].mxu0
      %744 = vmatprep.mubr.bf16.mxu0 %v481
      %745 = vmatmul.mubr.bf16.gmra.mrb[0].mxu0 %v480
      %v746 = vpop.f32.mrb[0].mxu0
      %v747 = vadd.f32 0.0, %v746
      %v748 = vpop.f32.mrb[0].mxu0
      %v749 = vpop.f32.mrb[0].mxu0
      %v750 = vadd.f32 0.0, %v749
      %v751 = vpop.f32.mrb[0].mxu0
      %752 = vmatprep.mubr.bf16.mxu0 %v483
      %753 = vmatmul.mubr.bf16.gmra.mrb[0].mxu0 %v482
      %v754 = vpop.f32.mrb[0].mxu0
      %v755 = vadd.f32 0.0, %v754
      %v756 = vpop.f32.mrb[0].mxu0
      %v757 = vpop.f32.mrb[0].mxu0
      %v758 = vadd.f32 0.0, %v757
      %v759 = vpop.f32.mrb[0].mxu0
      %760 = vmatprep.mubr.bf16.mxu0 %v485
      %761 = vmatmul.mubr.bf16.gmra.mrb[0].mxu0 %v484
      %v762 = vpop.f32.mrb[0].mxu0
      %v763 = vadd.f32 0.0, %v762
      %v764 = vpop.f32.mrb[0].mxu0
      %v765 = vpop.f32.mrb[0].mxu0
      %v766 = vadd.f32 0.0, %v765
      %v767 = vpop.f32.mrb[0].mxu0
      %768 = vmatprep.mubr.bf16.mxu0 %v487
      %769 = vmatmul.mubr.bf16.gmra.mrb[0].mxu0 %v486
      %v770 = vpop.f32.mrb[0].mxu0
      %v771 = vadd.f32 0.0, %v770
      %v772 = vpop.f32.mrb[0].mxu0
      %v773 = vpop.f32.mrb[0].mxu0
      %v774 = vadd.f32 0.0, %v773
      %v775 = vpop.f32.mrb[0].mxu0
      %776 = vdwg.mxu0
      %v777 = vadd.f32 %v264, %v651
      %v778 = vadd.f32 %v265, %v654
      %v779 = vadd.f32 %v266, %v659
      %v780 = vadd.f32 %v267, %v662
      %v781 = vadd.f32 %v268, %v667
      %v782 = vadd.f32 %v269, %v670
      %v783 = vadd.f32 %v270, %v675
      %v784 = vadd.f32 %v271, %v678
      %v785 = vadd.f32 %v272, %v683
      %v786 = vadd.f32 %v273, %v686
      %v787 = vadd.f32 %v274, %v691
      %v788 = vadd.f32 %v275, %v694
      %v789 = vadd.f32 %v276, %v699
      %v790 = vadd.f32 %v277, %v702
      %v791 = vadd.f32 %v278, %v707
      %v792 = vadd.f32 %v279, %v710
      %v793 = vadd.f32 %v280, %v715
      %v794 = vadd.f32 %v281, %v718
      %v795 = vadd.f32 %v282, %v723
      %v796 = vadd.f32 %v283, %v726
      %v797 = vadd.f32 %v284, %v731
      %v798 = vadd.f32 %v285, %v734
      %v799 = vadd.f32 %v286, %v739
      %v800 = vadd.f32 %v287, %v742
      %v801 = vadd.f32 %v288, %v747
      %v802 = vadd.f32 %v289, %v750
      %v803 = vadd.f32 %v290, %v755
      %v804 = vadd.f32 %v291, %v758
      %v805 = vadd.f32 %v292, %v763
      %v806 = vadd.f32 %v293, %v766
      %v807 = vadd.f32 %v294, %v771
      %v808 = vadd.f32 %v295, %v774
      %vm809 = vcmask 523264
      %810 = vst.msk [vmem:[#allocation2] sm:$0xff] %vm809, %v777
      %811 = vst.msk [vmem:[#allocation2 + $0x8] sm:$0xff] %vm809, %v778
      %812 = vst.msk [vmem:[#allocation2 + $0x10] sm:$0xff] %vm809, %v779
      %813 = vst.msk [vmem:[#allocation2 + $0x18] sm:$0xff] %vm809, %v780
      %814 = vst.msk [vmem:[#allocation2 + $0x20] sm:$0xff] %vm809, %v781
      %815 = vst.msk [vmem:[#allocation2 + $0x28] sm:$0xff] %vm809, %v782
      %816 = vst.msk [vmem:[#allocation2 + $0x30] sm:$0xff] %vm809, %v783
      %817 = vst.msk [vmem:[#allocation2 + $0x38] sm:$0xff] %vm809, %v784
      %818 = vst.msk [vmem:[#allocation2 + $0x40] sm:$0xff] %vm809, %v785
      %819 = vst.msk [vmem:[#allocation2 + $0x48] sm:$0xff] %vm809, %v786
      %820 = vst.msk [vmem:[#allocation2 + $0x50] sm:$0xff] %vm809, %v787
      %821 = vst.msk [vmem:[#allocation2 + $0x58] sm:$0xff] %vm809, %v788
      %822 = vst.msk [vmem:[#allocation2 + $0x60] sm:$0xff] %vm809, %v789
      %823 = vst.msk [vmem:[#allocation2 + $0x68] sm:$0xff] %vm809, %v790
      %824 = vst.msk [vmem:[#allocation2 + $0x70] sm:$0xff] %vm809, %v791
      %825 = vst.msk [vmem:[#allocation2 + $0x78] sm:$0xff] %vm809, %v792
      %826 = vst.msk [vmem:[#allocation2 + $0x80] sm:$0xff] %vm809, %v793
      %827 = vst.msk [vmem:[#allocation2 + $0x88] sm:$0xff] %vm809, %v794
      %828 = vst.msk [vmem:[#allocation2 + $0x90] sm:$0xff] %vm809, %v795
      %829 = vst.msk [vmem:[#allocation2 + $0x98] sm:$0xff] %vm809, %v796
      %830 = vst.msk [vmem:[#allocation2 + $0xa0] sm:$0xff] %vm809, %v797
      %831 = vst.msk [vmem:[#allocation2 + $0xa8] sm:$0xff] %vm809, %v798
      %832 = vst.msk [vmem:[#allocation2 + $0xb0] sm:$0xff] %vm809, %v799
      %833 = vst.msk [vmem:[#allocation2 + $0xb8] sm:$0xff] %vm809, %v800
      %834 = vst.msk [vmem:[#allocation2 + $0xc0] sm:$0xff] %vm809, %v801
      %835 = vst.msk [vmem:[#allocation2 + $0xc8] sm:$0xff] %vm809, %v802
      %836 = vst.msk [vmem:[#allocation2 + $0xd0] sm:$0xff] %vm809, %v803
      %837 = vst.msk [vmem:[#allocation2 + $0xd8] sm:$0xff] %vm809, %v804
      %838 = vst.msk [vmem:[#allocation2 + $0xe0] sm:$0xff] %vm809, %v805
      %839 = vst.msk [vmem:[#allocation2 + $0xe8] sm:$0xff] %vm809, %v806
      %840 = vst.msk [vmem:[#allocation2 + $0xf0] sm:$0xff] %vm809, %v807
      %841 = vst.msk [vmem:[#allocation2 + $0xf8] sm:$0xff] %vm809, %v808
      // Predicated region
      $region33: #{pallas_matmul.1} parent=27 // pred_check
        %p842 = pneg %p227
      $region34: #{pallas_matmul.1} parent=27 // pred_check_branch
        %844 = sbr.rel (%p842) target = $region36
      $region35: #{pallas_matmul.1} parent=27 // pred_region
        %v845 = vld [vmem:[#allocation2] sm:$0xff]
        %v846 = vld [vmem:[#allocation2 + $0x8] sm:$0xff]
        %v847 = vld [vmem:[#allocation2 + $0x10] sm:$0xff]
        %v848 = vld [vmem:[#allocation2 + $0x18] sm:$0xff]
        %v849 = vld [vmem:[#allocation2 + $0x20] sm:$0xff]
        %v850 = vld [vmem:[#allocation2 + $0x28] sm:$0xff]
        %v851 = vld [vmem:[#allocation2 + $0x30] sm:$0xff]
        %v852 = vld [vmem:[#allocation2 + $0x38] sm:$0xff]
        %v853 = vld [vmem:[#allocation2 + $0x40] sm:$0xff]
        %v854 = vld [vmem:[#allocation2 + $0x48] sm:$0xff]
        %v855 = vld [vmem:[#allocation2 + $0x50] sm:$0xff]
        %v856 = vld [vmem:[#allocation2 + $0x58] sm:$0xff]
        %v857 = vld [vmem:[#allocation2 + $0x60] sm:$0xff]
        %v858 = vld [vmem:[#allocation2 + $0x68] sm:$0xff]
        %v859 = vld [vmem:[#allocation2 + $0x70] sm:$0xff]
        %v860 = vld [vmem:[#allocation2 + $0x78] sm:$0xff]
        %v861 = vld [vmem:[#allocation2 + $0x80] sm:$0xff]
        %v862 = vld [vmem:[#allocation2 + $0x88] sm:$0xff]
        %v863 = vld [vmem:[#allocation2 + $0x90] sm:$0xff]
        %v864 = vld [vmem:[#allocation2 + $0x98] sm:$0xff]
        %v865 = vld [vmem:[#allocation2 + $0xa0] sm:$0xff]
        %v866 = vld [vmem:[#allocation2 + $0xa8] sm:$0xff]
        %v867 = vld [vmem:[#allocation2 + $0xb0] sm:$0xff]
        %v868 = vld [vmem:[#allocation2 + $0xb8] sm:$0xff]
        %v869 = vld [vmem:[#allocation2 + $0xc0] sm:$0xff]
        %v870 = vld [vmem:[#allocation2 + $0xc8] sm:$0xff]
        %v871 = vld [vmem:[#allocation2 + $0xd0] sm:$0xff]
        %v872 = vld [vmem:[#allocation2 + $0xd8] sm:$0xff]
        %v873 = vld [vmem:[#allocation2 + $0xe0] sm:$0xff]
        %v874 = vld [vmem:[#allocation2 + $0xe8] sm:$0xff]
        %v875 = vld [vmem:[#allocation2 + $0xf0] sm:$0xff]
        %v876 = vld [vmem:[#allocation2 + $0xf8] sm:$0xff]
        %877 = vst.msk [vmem:[%s224] sm:$0xff] %vm809, %v845
        %878 = vst.msk [vmem:[%s224 + $0x8] sm:$0xff] %vm809, %v846
        %879 = vst.msk [vmem:[%s224 + $0x10] sm:$0xff] %vm809, %v847
        %880 = vst.msk [vmem:[%s224 + $0x18] sm:$0xff] %vm809, %v848
        %881 = vst.msk [vmem:[%s224 + $0x20] sm:$0xff] %vm809, %v849
        %882 = vst.msk [vmem:[%s224 + $0x28] sm:$0xff] %vm809, %v850
        %883 = vst.msk [vmem:[%s224 + $0x30] sm:$0xff] %vm809, %v851
        %884 = vst.msk [vmem:[%s224 + $0x38] sm:$0xff] %vm809, %v852
        %885 = vst.msk [vmem:[%s224 + $0x40] sm:$0xff] %vm809, %v853
        %886 = vst.msk [vmem:[%s224 + $0x48] sm:$0xff] %vm809, %v854
        %887 = vst.msk [vmem:[%s224 + $0x50] sm:$0xff] %vm809, %v855
        %888 = vst.msk [vmem:[%s224 + $0x58] sm:$0xff] %vm809, %v856
        %889 = vst.msk [vmem:[%s224 + $0x60] sm:$0xff] %vm809, %v857
        %890 = vst.msk [vmem:[%s224 + $0x68] sm:$0xff] %vm809, %v858
        %891 = vst.msk [vmem:[%s224 + $0x70] sm:$0xff] %vm809, %v859
        %892 = vst.msk [vmem:[%s224 + $0x78] sm:$0xff] %vm809, %v860
        %893 = vst.msk [vmem:[%s224 + $0x80] sm:$0xff] %vm809, %v861
        %894 = vst.msk [vmem:[%s224 + $0x88] sm:$0xff] %vm809, %v862
        %895 = vst.msk [vmem:[%s224 + $0x90] sm:$0xff] %vm809, %v863
        %896 = vst.msk [vmem:[%s224 + $0x98] sm:$0xff] %vm809, %v864
        %897 = vst.msk [vmem:[%s224 + $0xa0] sm:$0xff] %vm809, %v865
        %898 = vst.msk [vmem:[%s224 + $0xa8] sm:$0xff] %vm809, %v866
        %899 = vst.msk [vmem:[%s224 + $0xb0] sm:$0xff] %vm809, %v867
        %900 = vst.msk [vmem:[%s224 + $0xb8] sm:$0xff] %vm809, %v868
        %901 = vst.msk [vmem:[%s224 + $0xc0] sm:$0xff] %vm809, %v869
        %902 = vst.msk [vmem:[%s224 + $0xc8] sm:$0xff] %vm809, %v870
        %903 = vst.msk [vmem:[%s224 + $0xd0] sm:$0xff] %vm809, %v871
        %904 = vst.msk [vmem:[%s224 + $0xd8] sm:$0xff] %vm809, %v872
        %905 = vst.msk [vmem:[%s224 + $0xe0] sm:$0xff] %vm809, %v873
        %906 = vst.msk [vmem:[%s224 + $0xe8] sm:$0xff] %vm809, %v874
        %907 = vst.msk [vmem:[%s224 + $0xf0] sm:$0xff] %vm809, %v875
        %908 = vst.msk [vmem:[%s224 + $0xf8] sm:$0xff] %vm809, %v876
      $region36: #{pallas_matmul.1} parent=27 // pred_fallthru
        _
      %s909 = smul.u32 32, %s18
      %p910 = scmp.lt.s32.totalorder %s909, 63
      %s911 = scalar_select %p910, %s909, 63
      %p912 = scmp.lt.s32.totalorder %s19, 0
      %s913 = scalar_select %p912, %s19, 0
      %s914 = sadd.s32 %s913, %s911
      %s915 = smul.addr %s914, 8
      %s916 = scalar_lea.vmem %s2, %s915
      // Predicated region
      $region37: #{pallas_matmul.1} parent=27 // pred_check
        %p917 = pneg %p108
      $region38: #{pallas_matmul.1} parent=27 // pred_check_branch
        %919 = sbr.rel (%p917) target = $region40
      $region39: #{pallas_matmul.1} parent=27 // pred_region
        %s920 = smul.u32 32, %s18
      $region40: #{pallas_matmul.1} parent=27 // pred_fallthru
        _
    $region28: #{pallas_matmul.1} parent=5 // pred_fallthru
      _
    %p921 = scmp.le.s32.totalorder 2, %s8
    // Predicated region
    $region41: #{pallas_matmul.1} parent=5 // pred_check
      %p922 = pneg %p921
    $region42: #{pallas_matmul.1} parent=5 // pred_check_branch
      %924 = sbr.rel (%p922) target = $region44
    $region43: #{pallas_matmul.1} parent=5 // pred_region
      %s925 = ssub.s32 %s8, 2
      // Predicated region
      $region45: #{pallas_matmul.1} parent=43 // pred_check
        %p926 = pneg %p114
      $region46: #{pallas_matmul.1} parent=43 // pred_check_branch
        %928 = sbr.rel (%p926) target = $region48
      $region47: #{pallas_matmul.1} parent=43 // pred_region
        %s929 = smul.u32 32, %s21
        %p930 = scmp.lt.s32.totalorder %s929, 63
        %s931 = scalar_select %p930, %s929, 63
        %p932 = scmp.lt.s32.totalorder %s22, 0
        %s933 = scalar_select %p932, %s22, 0
        %s934 = sadd.s32 %s933, %s931
        %s935 = smul.addr %s934, 8
        %s936 = scalar_lea.vmem %s2, %s935
      $region48: #{pallas_matmul.1} parent=43 // pred_fallthru
        _
    $region44: #{pallas_matmul.1} parent=5 // pred_fallthru
      _
  $region6: #{pallas_matmul.1} parent=0 // loop_footer
    %s12 = sadd.s32 1, %s8
  $region7: #{pallas_matmul.1} parent=0 // loop_footer_branch
    %7 = sbr.rel target = $region3
  $region8: #{pallas_matmul.1} parent=0 // loop_exit
    _

</llo_original>
